<compile_context>
chip_gen: v6e
topology: v6e:2x2x1
jax: 0.10.0
libtpu: 0.0.40
codegen_flags: <defaults>
</compile_context>

<pallas_src>
import jax
import jax.numpy as jnp
from jax.experimental import pallas as pl
from jax.experimental.pallas import tpu as pltpu


_TB_CAP = 512                          # max batch-rows per tile
_VMEM_TILE_BUDGET = 8 * 1024 * 1024    # bytes for one double-buffered input tile


def _round_up(x, m):
    return ((x + m - 1) // m) * m


def _linear_kernel(x_ref, w_ref, b_ref, o_ref):
    # x_ref: (TB, D) VMEM, w_ref: (1, D) VMEM, b_ref: (1,) SMEM, o_ref: (TB, 1).
    x = x_ref[...].astype(jnp.float32)          # upcast (free for f32, needed for bf16 on v5e)
    w = w_ref[...].astype(jnp.float32)          # (1, D) row, broadcasts over sublanes
    b = b_ref[0]                                # scalar bias from SMEM (one sld)
    # GEMV as VPU multiply + XLU lane reduction; no lane-degenerate MXU matmul.
    acc = jnp.sum(x * w, axis=-1, keepdims=True)   # (TB, 1) f32
    o_ref[...] = (acc + b).astype(o_ref.dtype)


def dnn_forward(f_in, weight, bias):
    """Forward of DNN.linear: f_in @ weight.T + bias.

    f_in:   (B, D) float32 or bfloat16
    weight: (1, D) (PyTorch nn.Linear layout)
    bias:   (1,)
    Returns (B, 1) float32.
    """
    B, D = f_in.shape
    dt_bytes = jnp.dtype(f_in.dtype).itemsize

    # Choose the batch tile: big enough to amortize per-step overhead (~0.35 us),
    # small enough that 2 buffers x TB x D stays well inside VMEM on v7x (64 MiB).
    tb = _VMEM_TILE_BUDGET // max(1, 2 * D * dt_bytes)
    tb = max(8, min(_TB_CAP, (tb // 8) * 8))
    if B <= tb:
        tb = _round_up(B, 8)              # single tile, padded to sublane multiple
    b_pad = _round_up(B, tb)

    x = f_in
    if b_pad != B:
        x = jnp.pad(f_in, ((0, b_pad - B), (0, 0)))   # padded rows are sliced off below

    w_row = weight.reshape(1, D)
    b_vec = bias.reshape(1).astype(jnp.float32)

    out = pl.pallas_call(
        _linear_kernel,
        out_shape=jax.ShapeDtypeStruct((b_pad, 1), jnp.float32),
        grid_spec=pltpu.PrefetchScalarGridSpec(
            num_scalar_prefetch=0,
            grid=(b_pad // tb,),
            in_specs=[
                pl.BlockSpec((tb, D), lambda i: (i, 0)),              # f_in row tile (pipelined)
                pl.BlockSpec((1, D), lambda i: (0, 0)),               # weight row, resident
                pl.BlockSpec(memory_space=pltpu.MemorySpace.SMEM),    # bias scalar in SMEM
            ],
            out_specs=pl.BlockSpec((tb, 1), lambda i: (i, 0)),
        ),
        compiler_params=pltpu.CompilerParams(
            dimension_semantics=("parallel",),   # lets v7x shard tiles across both TCs
        ),
    )(x, w_row, b_vec)

    return out[:B]


def init_params(key, in_dim):
    """Mirror torch.nn.Linear default init (U[-1/sqrt(fan_in), 1/sqrt(fan_in)]).

    Only `self.linear` is used by forward; the `self.m` Sequential params are
    dead code and not materialized.
    """
    k_w, k_b = jax.random.split(key)
    bound = 1.0 / jnp.sqrt(jnp.float32(in_dim))
    weight = jax.random.uniform(k_w, (1, in_dim), jnp.float32, -bound, bound)
    bias = jax.random.uniform(k_b, (1,), jnp.float32, -bound, bound)
    return weight, bias


if __name__ == "__main__":
    key = jax.random.PRNGKey(0)
    k_in, k_params, k_in2 = jax.random.split(key, 3)

    # 1) Small shape consistent with the module (B=8, in_dim=32).
    B, in_dim = 8, 32
    f_in = jax.random.normal(k_in, (B, in_dim), jnp.float32)
    weight, bias = init_params(k_params, in_dim)

    out = dnn_forward(f_in, weight, bias)
    jax.block_until_ready(out)

    ref = jnp.sum(f_in * weight, axis=-1, keepdims=True) + bias
    assert out.shape == (B, 1)
    assert jnp.allclose(out, ref, atol=1e-5, rtol=1e-5)

    # 2) Larger, non-multiple batch to exercise the tiled/pipelined path + padding.
    B2, D2 = 1000, 256
    f_in2 = jax.random.normal(k_in2, (B2, D2), jnp.float32)
    w2, b2 = init_params(k_params, D2)

    out2 = dnn_forward(f_in2, w2, b2)
    jax.block_until_ready(out2)

    ref2 = jnp.sum(f_in2 * w2, axis=-1, keepdims=True) + b2
    assert out2.shape == (B2, 1)
    assert jnp.allclose(out2, ref2, atol=1e-4, rtol=1e-4)

    print("KERNEL_OK")
</pallas_src>

<mosaic_0001>
module attributes {stable_mosaic.version = 11 : i64} {
  func.func @_linear_kernel(%arg0: i32, %arg1: memref<8x32xf32, #tpu.memory_space<vmem>>, %arg2: memref<1x32xf32, #tpu.memory_space<vmem>>, %arg3: memref<1xf32, #tpu.memory_space<smem>>, %arg4: memref<8x1xf32, #tpu.memory_space<vmem>>) attributes {dimension_semantics = [#tpu.dimension_semantics<parallel>], iteration_bounds = array<i64: 1>, scalar_prefetch = 0 : i64, scratch_operands = 0 : i64, tpu.core_type = #tpu.core_type<tc>, window_params = [{transform_indices = @transform_0, window_bounds = array<i64: 8, 32>}, {pipeline_mode = #tpu.pipeline_mode<synchronous>, transform_indices = @transform_1, window_bounds = array<i64: 1, 32>}, {transform_indices = @transform_2, window_bounds = array<i64: 1>}, {transform_indices = @transform_3, window_bounds = array<i64: 8, 1>}]} {
    %c0 = arith.constant 0 : index
    %c0_0 = arith.constant 0 : index
    %0 = vector.load %arg1[%c0, %c0_0] : memref<8x32xf32, #tpu.memory_space<vmem>>, vector<8x32xf32>
    %c0_1 = arith.constant 0 : index
    %c0_2 = arith.constant 0 : index
    %1 = vector.load %arg2[%c0_1, %c0_2] : memref<1x32xf32, #tpu.memory_space<vmem>>, vector<1x32xf32>
    %c0_3 = arith.constant 0 : index
    %2 = memref.load %arg3[%c0_3] : memref<1xf32, #tpu.memory_space<smem>>
    %3 = vector.broadcast %1 : vector<1x32xf32> to vector<8x32xf32>
    %4 = arith.mulf %0, %3 : vector<8x32xf32>
    %cst = arith.constant dense<0.000000e+00> : vector<8xf32>
    %5 = vector.multi_reduction <add>, %4, %cst [1] : vector<8x32xf32> to vector<8xf32>
    %6 = vector.shape_cast %5 : vector<8xf32> to vector<8x1xf32>
    %7 = vector.broadcast %2 : f32 to vector<8x1xf32>
    %8 = arith.addf %6, %7 : vector<8x1xf32>
    %c0_4 = arith.constant 0 : index
    %c0_5 = arith.constant 0 : index
    %9 = vector.load %arg4[%c0_4, %c0_5] : memref<8x1xf32, #tpu.memory_space<vmem>>, vector<8x1xf32>
    tpu.vector_store %arg4[%c0_4, %c0_5], %8 {strides = array<i32>} : memref<8x1xf32, #tpu.memory_space<vmem>>, vector<8x1xf32>,
    return
  }
  func.func @transform_0(%arg0: i32) -> (i32, i32) {
    %c0_i32 = arith.constant 0 : i32
    %c0_i32_0 = arith.constant 0 : i32
    return %arg0, %c0_i32 : i32, i32
  }
  func.func @transform_1(%arg0: i32) -> (i32, i32) {
    %c0_i32 = arith.constant 0 : i32
    %c0_i32_0 = arith.constant 0 : i32
    %c0_i32_1 = arith.constant 0 : i32
    return %c0_i32, %c0_i32_0 : i32, i32
  }
  func.func @transform_2(%arg0: i32) -> i32 {
    %c0_i32 = arith.constant 0 : i32
    %c0_i32_0 = arith.constant 0 : i32
    return %c0_i32 : i32
  }
  func.func @transform_3(%arg0: i32) -> (i32, i32) {
    %c0_i32 = arith.constant 0 : i32
    %c0_i32_0 = arith.constant 0 : i32
    return %arg0, %c0_i32 : i32, i32
  }
}

</mosaic_0001>

<llo_original>
// kernel: tpu_custom_call.1
$region0: #{tpu_custom_call.1}
  #allocation0 [shape = 'u32[]', space=smem, size = 0x4, offset = 0x4, fixed_abs, tag = 'smem constant byte address 0x4 - core index']
  #allocation1 [shape = 'u32[144,128]{1,0:T(1,128)}', space=vmem, size = 0x12000, scoped, tag = 'internal scratch']
  #allocation2 [shape = 'f32[1]{0:T(128)S(6)}', space=smem, size = 0x200, scoped, tag = 'scoped memory for tpu_custom_call.1']
  %s0 = inlined_call_operand.hbm [shape: f32[8,32], index: 0, kind: input, shape index: {}]
  %s1 = inlined_call_operand.vmem [shape: f32[1,32], index: 1, kind: input, shape index: {}]
  %s2 = inlined_call_operand.<no memory space> [shape: f32[1], index: 2, kind: input, shape index: {}]
  %s3 = inlined_call_operand.vmem [shape: f32[8,1], index: 3, kind: output, shape index: {}]
  %s4 = sld [smem:[#allocation0]]
  $region26: #{tpu_custom_call.1} parent=0
    _
  %s6 = ssub.s32 1, %s4
  %s7 = scalar_select 0, %s6, %s4
  %8 = sst [smem:[#allocation2]] %s2
  $region1: #{tpu_custom_call.1} parent=0
    #allocation3 [shape = 'u8[4096]{0}', space=vmem, size = 0x1000, scoped, tag = 'input window, operand 0, single buffered']
    #allocation4 [shape = 's32[1]{0}', space=sflag, size = 0x4, scoped, tag = 'scoped memory for tpu_custom_call.1']
    %9 = vsyncpa [#allocation4], 0
    // Predicated region
    $region2: #{tpu_custom_call.1} parent=1 // pred_check
      _
    $region3: #{tpu_custom_call.1} parent=1 // pred_check_branch
      %11 = sbr.rel (0) target = $region5
    $region4: #{tpu_custom_call.1} parent=1 // pred_region
      %s13 = ssub.s32 128, 128
      %14 = vsyncadd [#allocation4], %s13
      %s16 = sshll.u32 [#allocation3], 4
      %s17 = int_to_ptr.vmem [resolvable:$true] %s16
      %19 = dma.hbm_to_vmem [thread:$0]  %s0, 128, %s17, [#allocation4]
    $region5: #{tpu_custom_call.1} parent=1 // pred_fallthru
      _
    // Predicated region
    $region6: #{tpu_custom_call.1} parent=1 // pred_check
      _
    $region7: #{tpu_custom_call.1} parent=1 // pred_check_branch
      %21 = sbr.rel (0) target = $region9
    $region8: #{tpu_custom_call.1} parent=1 // pred_region
      _
    $region9: #{tpu_custom_call.1} parent=1 // pred_fallthru
      _
    // Predicated region
    $region10: #{tpu_custom_call.1} parent=1 // pred_check
      _
    $region11: #{tpu_custom_call.1} parent=1 // pred_check_branch
      %23 = sbr.rel (0) target = $region13
    $region12: #{tpu_custom_call.1} parent=1 // pred_region
      _
    $region13: #{tpu_custom_call.1} parent=1 // pred_fallthru
      _
    // Predicated region
    $region14: #{tpu_custom_call.1} parent=1 // pred_check
      _
    $region15: #{tpu_custom_call.1} parent=1 // pred_check_branch
      %25 = sbr.rel (0) target = $region17
    $region16: #{tpu_custom_call.1} parent=1 // pred_region
      %26 = dma.done [#allocation4], 128
    $region17: #{tpu_custom_call.1} parent=1 // pred_fallthru
      _
    %v27 = vld [vmem:[#allocation3] sm:$0xff]
    %v28 = vld [vmem:[%s1] sm:$0x1]
    %s29 = sld [smem:[#allocation2]]
    %v31 = vlaneseq
    %v32 = vshrl.u32 %v31, 7
    %v33 = vsub.s32 0, %v32
    %v34 = vrot.slane %v28, %v33
    %v36 = vmul.f32 %v27, %v34
    %vm37 = vcmask 261120
    %v38 = vsel %vm37, %v36, 0.0
    %39 = vadd.xlane.f32.xlu0 %v38
    %v40 = vpop.xlane.xlu0 %39
    %v41 = vstv %s29
    %v42 = vadd.f32 %v40, %v41
    %vm43 = vcmask 7168
    %44 = vst.msk [vmem:[%s3] sm:$0xff] %vm43, %v42
    // Predicated region
    $region18: #{tpu_custom_call.1} parent=1 // pred_check
      _
    $region19: #{tpu_custom_call.1} parent=1 // pred_check_branch
      %46 = sbr.rel (0) target = $region21
    $region20: #{tpu_custom_call.1} parent=1 // pred_region
      _
    $region21: #{tpu_custom_call.1} parent=1 // pred_fallthru
      _
    // Predicated region
    $region22: #{tpu_custom_call.1} parent=1 // pred_check
      _
    $region23: #{tpu_custom_call.1} parent=1 // pred_check_branch
      %48 = sbr.rel (0) target = $region25
    $region24: #{tpu_custom_call.1} parent=1 // pred_region
      _
    $region25: #{tpu_custom_call.1} parent=1 // pred_fallthru
      _
    %49 = vsyncpa [#allocation4], 1

</llo_original>
